<compile_context>
chip_gen: v6e
topology: v6e:2x2x1
jax: 0.10.0
libtpu: 0.0.40
codegen_flags: <defaults>
</compile_context>

<pallas_src>
import numpy as np
import jax
import jax.numpy as jnp
from jax import lax
from jax.experimental import pallas as pl
from jax.experimental.pallas import tpu as pltpu

N_QUBITS = 8
N_LAYERS = 7
DIM = 2 ** N_QUBITS          # 256 amplitudes
IMG = 16                     # input is 16x16x1 (conv stack -> 4ch x 4 x 4 = 64 feats)
F_IN = IMG * IMG             # 256 flattened input pixels (lane-aligned)
WC_ROWS = 896                # packed matrix slab rows: 256+128+128+256+128
VEC_ROWS = 16                # packed bias/vector slab rows (10 used, padded to 16)


# ---------------------------------------------------------------------------
# Quantum circuit precompute (host-side parameter setup, numpy f64).
# PennyLane convention: wire 0 is the MSB of the state index.
#   RY(t) = [[cos(t/2), -sin(t/2)], [sin(t/2), cos(t/2)]] ; CNOT(c,t): t ^= c
# The weight-dependent circuit is a fixed real orthogonal matrix U;
# <Z_0> = sum_k z_k (U psi)_k^2 with z_k = +1 if MSB(k)==0 else -1.
# ---------------------------------------------------------------------------
def build_quantum_unitary(weights_np):
    n, dim = N_QUBITS, DIM
    U = np.eye(dim, dtype=np.float64)          # columns = evolved basis states
    for layer in range(weights_np.shape[0]):
        for q in range(n):
            theta = float(weights_np[layer, q])
            c, s = np.cos(theta / 2.0), np.sin(theta / 2.0)
            R = np.array([[c, -s], [s, c]], dtype=np.float64)
            T = U.reshape((2,) * n + (dim,))
            T = np.tensordot(R, T, axes=([1], [q]))
            T = np.moveaxis(T, 0, q)
            U = T.reshape(dim, dim)
        for q in range(n - 1):                 # CNOT chain: control q, target q+1
            T = U.reshape((2,) * n + (dim,)).copy()
            idx1 = [slice(None)] * (n + 1)
            idx1[q] = 1
            T[tuple(idx1)] = np.flip(T[tuple(idx1)], axis=q)
            U = T.reshape(dim, dim)
    return U


# ---------------------------------------------------------------------------
# Fused Pallas kernel: conv1/2/3 (as dense maps) -> Linear(64,256)+ReLU ->
# folded L2-norm + quantum expectation -> classifier MLP -> sigmoid.
# One batch tile per grid step; all weights are constant-index resident blocks.
# ---------------------------------------------------------------------------
def fused_model_kernel(x_ref, wc_ref, fcw_ref, ut_ref, vec_ref, out_ref):
    f32, bf16 = jnp.float32, jnp.bfloat16
    dot = lambda a, b: jnp.dot(a, b, preferred_element_type=f32)
    relu = lambda v: jnp.maximum(v, 0.0)

    x = x_ref[...]                                      # (TB, 256) bf16 flattened image

    V = vec_ref[...]                                    # (16, 256) packed f32 row vectors
    c1b, c2b, c3b = V[0:1, :128], V[1:2, :128], V[2:3, :128]
    fcb = V[3:4, :]
    w1, b1 = V[4:5, :], V[5:6, :]
    b2, b3, w4 = V[6:7, :128], V[7:8, :128], V[8:9, :128]
    b4 = V[9:10, 0:1]

    # CNN front-end: each conv is an exact dense linear map on the C-major
    # flattened activations; AdaptiveAvgPool2d(4) is identity on the 4x4 map.
    # All dots are bf16 x bf16 -> f32 accumulation on the MXU.
    h = relu(dot(x, wc_ref[0:256, :]) + c1b)                     # Conv(1,2,5,s2,p2)+ReLU
    h = relu(dot(h.astype(bf16), wc_ref[256:384, :]) + c2b)      # Conv(2,3,3,s2,p1)+ReLU
    h = relu(dot(h.astype(bf16), wc_ref[384:512, :]) + c3b)      # Conv(3,4,3,s1,p1)+ReLU
    # (lanes >= 48 / >= 64 of the last two stay exactly zero: zero-padded W+bias)

    # Linear(64,256) + ReLU   (Dropout(0.3) identity at inference)
    h = relu(dot(h.astype(bf16), fcw_ref[...]) + fcb)            # (TB, 256) f32

    # F.normalize(p=2) + AmplitudeEmbedding(normalize=True) + circuit, folded:
    #   <Z_0> = (sum_{k<128} g_k^2 - sum_{k>=128} g_k^2) / sum_k h_k^2 , g = h @ U^T
    # (z_k = +-1 is the MSB sign pattern, so no explicit z multiply is needed.)
    s = jnp.sum(h * h, axis=-1, keepdims=True)                   # (TB, 1) squared norm
    g = dot(h.astype(bf16), ut_ref[...])                         # (TB, 256), f32 acc
    g2 = g * g
    num = (jnp.sum(g2[:, :128], axis=-1, keepdims=True)
           - jnp.sum(g2[:, 128:], axis=-1, keepdims=True))       # (TB, 1)
    q = num * pl.reciprocal(jnp.maximum(s, 1e-24), approx=True)  # (TB, 1)

    # classifier MLP (Dropouts identity; dims lane-padded with zeros -> exact)
    a = relu(q * w1 + b1)                                        # Linear(1,167)   + ReLU
    a = relu(dot(a.astype(bf16), wc_ref[512:768, :]) + b2)       # Linear(167,120) + ReLU
    a = relu(dot(a.astype(bf16), wc_ref[768:896, :]) + b3)       # Linear(120,64)  + ReLU
    logit = jnp.sum(a * w4, axis=-1, keepdims=True) + b4         # Linear(64,1)
    out_ref[...] = 1.0 / (1.0 + jnp.exp(-logit))                 # Sigmoid, slim store


def pick_tile_b(batch):
    """Large, overhead-amortizing batch tile; keeps >=2 grid steps whenever the
    batch is big enough so both v7x TensorCores get work ('parallel' grid axis)."""
    TB_MAX = 512
    b8 = max(8, ((batch + 7) // 8) * 8)
    if b8 <= 16:
        return b8                            # single tile == full (padded) batch
    half = (b8 + 1) // 2
    tb = ((half + 15) // 16) * 16            # multiple of 16 (bf16 sublane packing)
    return min(TB_MAX, tb)


def model_forward(x, packed):
    B = x.shape[0]
    # bf16 input halves the dominant per-tile HBM read; C-major flatten.
    x_flat = x.reshape(B, -1).astype(jnp.bfloat16)       # (B, 256)
    tb = pick_tile_b(B)
    bp = ((B + tb - 1) // tb) * tb
    if bp != B:
        x_flat = jnp.pad(x_flat, ((0, bp - B), (0, 0)))

    macs_per_row = (256 * 128 + 128 * 128 + 128 * 128 + 128 * 256
                    + 256 * 256 + 256 * 128 + 128 * 128)          # ~213k
    weight_bytes = (WC_ROWS * 128 * 2 + 128 * 256 * 2
                    + 256 * 256 * 2 + VEC_ROWS * 256 * 4)
    cost = pl.CostEstimate(
        flops=2 * bp * macs_per_row,
        transcendentals=2 * bp,
        bytes_accessed=bp * F_IN * 2 + bp * 4 + weight_bytes)

    out = pl.pallas_call(
        fused_model_kernel,
        out_shape=jax.ShapeDtypeStruct((bp, 1), jnp.float32),
        grid=(bp // tb,),
        in_specs=[
            pl.BlockSpec((tb, F_IN), lambda i: (i, 0)),        # batch-tiled input (bf16)
            pl.BlockSpec((WC_ROWS, 128), lambda i: (0, 0)),    # packed bf16 matrices
            pl.BlockSpec((128, 256), lambda i: (0, 0)),        # fcw (bf16, resident)
            pl.BlockSpec((256, 256), lambda i: (0, 0)),        # U^T (bf16, resident)
            pl.BlockSpec((VEC_ROWS, 256), lambda i: (0, 0)),   # packed f32 biases/vectors
        ],
        out_specs=pl.BlockSpec((tb, 1), lambda i: (i, 0)),     # slim (TB,1) writeback
        compiler_params=pltpu.CompilerParams(dimension_semantics=("parallel",)),
        cost_estimate=cost,
    )(x_flat, packed["wc"], packed["fcw"], packed["ut"], packed["vec"])
    return out[:B]


# ---------------------------------------------------------------------------
# Host-side parameter setup: build dense conv matrices + packed slabs.
# ---------------------------------------------------------------------------
def conv_as_dense(w, b, stride, pad, in_shape):
    """Dense M (n_in, n_out) and bias row (1, n_out) such that
    flatten(conv2d(x)) == flatten(x) @ M + bias   (C-major flattening)."""
    C, H, W = in_shape
    n_in = C * H * W
    basis = jnp.eye(n_in, dtype=jnp.float32).reshape(n_in, C, H, W)
    y = lax.conv_general_dilated(
        basis, w, window_strides=(stride, stride),
        padding=((pad, pad), (pad, pad)),
        dimension_numbers=("NCHW", "OIHW", "NCHW"))
    out_shape = y.shape[1:]
    M = y.reshape(n_in, -1)
    bias = jnp.broadcast_to(b.reshape(-1, 1, 1), out_shape).reshape(1, -1)
    return M, bias, out_shape


def pad_to(a, shape):
    return jnp.pad(a, [(0, t - s) for s, t in zip(a.shape, shape)])


def build_packed(p):
    c1d, c1b, s1 = conv_as_dense(p["c1w"], p["c1b"], 2, 2, (1, IMG, IMG))  # (256,128)
    c2d, c2b, s2 = conv_as_dense(p["c2w"], p["c2b"], 2, 1, s1)             # (128, 48)
    c3d, c3b, s3 = conv_as_dense(p["c3w"], p["c3b"], 1, 1, s2)             # ( 48, 64)
    assert tuple(s3[-2:]) == (4, 4)  # AdaptiveAvgPool2d(4) is identity here
    # TODO(synk): for input sizes other than 16x16 the AdaptiveAvgPool2d(4)
    # averaging matrix would additionally have to be folded into c3d.

    wc = jnp.concatenate([
        pad_to(c1d, (256, 128)),
        pad_to(c2d, (128, 128)),
        pad_to(c3d, (128, 128)),
        pad_to(p["w2"], (256, 128)),
        pad_to(p["w3"], (128, 128)),
    ], axis=0).astype(jnp.bfloat16)                      # (896, 128) bf16 slab

    vec_rows = [
        pad_to(c1b, (1, 256)), pad_to(c2b, (1, 256)), pad_to(c3b, (1, 256)),
        p["fcb"].reshape(1, 256),
        pad_to(p["w1"], (1, 256)), pad_to(p["b1"], (1, 256)),
        pad_to(p["b2"], (1, 256)), pad_to(p["b3"], (1, 256)),
        pad_to(p["w4"], (1, 256)), pad_to(p["b4"], (1, 256)),
    ]
    vec = jnp.concatenate(
        vec_rows + [jnp.zeros((VEC_ROWS - len(vec_rows), 256), jnp.float32)], axis=0)

    return {
        "wc": wc,
        "fcw": pad_to(p["fcw"], (128, 256)).astype(jnp.bfloat16),
        "ut": p["ut"].astype(jnp.bfloat16),
        "vec": vec.astype(jnp.float32),
    }


def init_raw_params(key):
    ks = jax.random.split(key, 12)
    rnd = lambda k, shape, s: jax.random.normal(k, shape, dtype=jnp.float32) * s
    p = {}
    p["c1w"] = rnd(ks[0], (2, 1, 5, 5), 0.2); p["c1b"] = jnp.full((2,), 0.01, jnp.float32)
    p["c2w"] = rnd(ks[1], (3, 2, 3, 3), 0.2); p["c2b"] = jnp.full((3,), 0.01, jnp.float32)
    p["c3w"] = rnd(ks[2], (4, 3, 3, 3), 0.2); p["c3b"] = jnp.full((4,), 0.01, jnp.float32)
    p["fcw"] = rnd(ks[3], (64, 256), 0.1);    p["fcb"] = rnd(ks[4], (256,), 0.05)
    p["w1"] = rnd(ks[5], (1, 167), 0.5);      p["b1"] = rnd(ks[6], (1, 167), 0.1)
    p["w2"] = rnd(ks[7], (167, 120), 0.1);    p["b2"] = jnp.zeros((1, 120), jnp.float32)
    p["w3"] = rnd(ks[8], (120, 64), 0.1);     p["b3"] = jnp.zeros((1, 64), jnp.float32)
    p["w4"] = rnd(ks[9], (1, 64), 0.1);       p["b4"] = jnp.zeros((1, 1), jnp.float32)
    # quantum circuit weights (n_layers=7, n_qubits=8) -> fixed orthogonal U (f64)
    qw = np.asarray(jax.random.uniform(ks[10], (N_LAYERS, N_QUBITS),
                                       dtype=jnp.float32, minval=0.0, maxval=np.pi),
                    dtype=np.float64)
    U = build_quantum_unitary(qw)
    p["ut"] = jnp.asarray(U.T, dtype=jnp.float32)        # psi_out = psi_in @ U^T
    z = 1.0 - 2.0 * ((np.arange(DIM) >> (N_QUBITS - 1)) & 1).astype(np.float64)
    p["z"] = jnp.asarray(z.reshape(1, DIM), dtype=jnp.float32)   # reference only
    return p


# ---------------------------------------------------------------------------
# Pure-JAX reference of the module forward (correctness check only).
# Weights are passed through bf16 to mirror the kernel's bf16 storage so the
# check isolates kernel structure rather than weight quantization.
# ---------------------------------------------------------------------------
def conv2d(x, w, b, stride, pad):
    y = lax.conv_general_dilated(
        x, w, window_strides=(stride, stride),
        padding=((pad, pad), (pad, pad)),
        dimension_numbers=("NCHW", "OIHW", "NCHW"))
    return y + b.reshape(1, -1, 1, 1)


def reference_forward(x, p):
    qz = lambda a: a.astype(jnp.bfloat16).astype(jnp.float32)
    h = jax.nn.relu(conv2d(qz(x), qz(p["c1w"]), p["c1b"], 2, 2))
    h = jax.nn.relu(conv2d(h, qz(p["c2w"]), p["c2b"], 2, 1))
    h = jax.nn.relu(conv2d(h, qz(p["c3w"]), p["c3b"], 1, 1))
    B, C, H, W = h.shape
    h = h.reshape(B, C, 4, H // 4, 4, W // 4).mean(axis=(3, 5))   # AdaptiveAvgPool2d(4)
    feat = h.reshape(B, C * 16)                                   # Flatten -> (B, 64)
    h = jax.nn.relu(feat @ qz(p["fcw"]) + p["fcb"].reshape(1, -1))
    norm = jnp.sqrt(jnp.sum(h * h, axis=-1, keepdims=True))
    psi = h / jnp.maximum(norm, 1e-12)
    g = psi @ qz(p["ut"])
    q = jnp.sum(g * g * p["z"], axis=-1, keepdims=True)
    a = jax.nn.relu(q * p["w1"] + p["b1"])
    a = jax.nn.relu(a @ qz(p["w2"]) + p["b2"])
    a = jax.nn.relu(a @ qz(p["w3"]) + p["b3"])
    logit = a @ p["w4"].T + p["b4"]
    return jax.nn.sigmoid(logit)


if __name__ == "__main__":
    raw = init_raw_params(jax.random.PRNGKey(42))
    packed = build_packed(raw)

    # 16x16 single-channel input -> conv chain yields 4x4x4 = 64 features.
    x = jax.random.normal(jax.random.PRNGKey(0), (2, 1, IMG, IMG), dtype=jnp.float32)

    fwd = jax.jit(model_forward)
    out = jax.block_until_ready(fwd(x, packed))

    ref = reference_forward(x, raw)

    assert out.shape == (2, 1), out.shape
    assert bool(jnp.all(jnp.isfinite(out)))
    assert bool(jnp.allclose(out, ref, atol=2e-2, rtol=2e-2)), (out, ref)
    print("KERNEL_OK")
</pallas_src>

<mosaic_0001>
module attributes {stable_mosaic.version = 11 : i64} {
  func.func @fused_model_kernel(%arg0: i32, %arg1: memref<8x256xbf16, #tpu.memory_space<vmem>>, %arg2: memref<896x128xbf16, #tpu.memory_space<vmem>>, %arg3: memref<128x256xbf16, #tpu.memory_space<vmem>>, %arg4: memref<256x256xbf16, #tpu.memory_space<vmem>>, %arg5: memref<16x256xf32, #tpu.memory_space<vmem>>, %arg6: memref<8x1xf32, #tpu.memory_space<vmem>>) attributes {dimension_semantics = [#tpu.dimension_semantics<parallel>], iteration_bounds = array<i64: 1>, scalar_prefetch = 0 : i64, scratch_operands = 0 : i64, tpu.core_type = #tpu.core_type<tc>, window_params = [{transform_indices = @transform_0, window_bounds = array<i64: 8, 256>}, {pipeline_mode = #tpu.pipeline_mode<synchronous>, transform_indices = @transform_1, window_bounds = array<i64: 896, 128>}, {pipeline_mode = #tpu.pipeline_mode<synchronous>, transform_indices = @transform_2, window_bounds = array<i64: 128, 256>}, {pipeline_mode = #tpu.pipeline_mode<synchronous>, transform_indices = @transform_3, window_bounds = array<i64: 256, 256>}, {pipeline_mode = #tpu.pipeline_mode<synchronous>, transform_indices = @transform_4, window_bounds = array<i64: 16, 256>}, {transform_indices = @transform_5, window_bounds = array<i64: 8, 1>}]} {
    %c0 = arith.constant 0 : index
    %c0_0 = arith.constant 0 : index
    %0 = vector.load %arg1[%c0, %c0_0] : memref<8x256xbf16, #tpu.memory_space<vmem>>, vector<8x256xbf16>
    %c0_1 = arith.constant 0 : index
    %c0_2 = arith.constant 0 : index
    %1 = vector.load %arg5[%c0_1, %c0_2] : memref<16x256xf32, #tpu.memory_space<vmem>>, vector<16x256xf32>
    %2 = vector.extract_strided_slice %1 {offsets = [0, 0], sizes = [1, 128], strides = [1, 1]} : vector<16x256xf32> to vector<1x128xf32>
    %3 = vector.extract_strided_slice %1 {offsets = [1, 0], sizes = [1, 128], strides = [1, 1]} : vector<16x256xf32> to vector<1x128xf32>
    %4 = vector.extract_strided_slice %1 {offsets = [2, 0], sizes = [1, 128], strides = [1, 1]} : vector<16x256xf32> to vector<1x128xf32>
    %5 = vector.extract_strided_slice %1 {offsets = [3, 0], sizes = [1, 256], strides = [1, 1]} : vector<16x256xf32> to vector<1x256xf32>
    %6 = vector.extract_strided_slice %1 {offsets = [4, 0], sizes = [1, 256], strides = [1, 1]} : vector<16x256xf32> to vector<1x256xf32>
    %7 = vector.extract_strided_slice %1 {offsets = [5, 0], sizes = [1, 256], strides = [1, 1]} : vector<16x256xf32> to vector<1x256xf32>
    %8 = vector.extract_strided_slice %1 {offsets = [6, 0], sizes = [1, 128], strides = [1, 1]} : vector<16x256xf32> to vector<1x128xf32>
    %9 = vector.extract_strided_slice %1 {offsets = [7, 0], sizes = [1, 128], strides = [1, 1]} : vector<16x256xf32> to vector<1x128xf32>
    %10 = vector.extract_strided_slice %1 {offsets = [8, 0], sizes = [1, 128], strides = [1, 1]} : vector<16x256xf32> to vector<1x128xf32>
    %11 = vector.extract_strided_slice %1 {offsets = [9, 0], sizes = [1, 1], strides = [1, 1]} : vector<16x256xf32> to vector<1x1xf32>
    %c0_3 = arith.constant 0 : index
    %c0_4 = arith.constant 0 : index
    %12 = vector.load %arg2[%c0_3, %c0_4] : memref<896x128xbf16, #tpu.memory_space<vmem>>, vector<256x128xbf16>
    %cst = arith.constant dense<0.000000e+00> : vector<8x128xf32>
    %13 = tpu.matmul %0, %12, %cst {dimension_numbers = #tpu.dot_dimension_numbers<[1], [0], [0], [1], [0, 0, 1, 1], [], []>} : vector<8x256xbf16>, vector<256x128xbf16>, vector<8x128xf32> -> vector<8x128xf32>
    %14 = vector.broadcast %2 : vector<1x128xf32> to vector<8x128xf32>
    %15 = arith.addf %13, %14 : vector<8x128xf32>
    %cst_5 = arith.constant 0.000000e+00 : f32
    %16 = vector.broadcast %cst_5 : f32 to vector<8x128xf32>
    %17 = arith.maximumf %15, %16 : vector<8x128xf32>
    %18 = arith.truncf %17 : vector<8x128xf32> to vector<8x128xbf16>
    %c256 = arith.constant 256 : index
    %c0_6 = arith.constant 0 : index
    %19 = vector.load %arg2[%c256, %c0_6] : memref<896x128xbf16, #tpu.memory_space<vmem>>, vector<128x128xbf16>
    %cst_7 = arith.constant dense<0.000000e+00> : vector<8x128xf32>
    %20 = tpu.matmul %18, %19, %cst_7 {dimension_numbers = #tpu.dot_dimension_numbers<[1], [0], [0], [1], [0, 0, 1, 1], [], []>} : vector<8x128xbf16>, vector<128x128xbf16>, vector<8x128xf32> -> vector<8x128xf32>
    %21 = vector.broadcast %3 : vector<1x128xf32> to vector<8x128xf32>
    %22 = arith.addf %20, %21 : vector<8x128xf32>
    %cst_8 = arith.constant 0.000000e+00 : f32
    %23 = vector.broadcast %cst_8 : f32 to vector<8x128xf32>
    %24 = arith.maximumf %22, %23 : vector<8x128xf32>
    %25 = arith.truncf %24 : vector<8x128xf32> to vector<8x128xbf16>
    %c384 = arith.constant 384 : index
    %c0_9 = arith.constant 0 : index
    %26 = vector.load %arg2[%c384, %c0_9] : memref<896x128xbf16, #tpu.memory_space<vmem>>, vector<128x128xbf16>
    %cst_10 = arith.constant dense<0.000000e+00> : vector<8x128xf32>
    %27 = tpu.matmul %25, %26, %cst_10 {dimension_numbers = #tpu.dot_dimension_numbers<[1], [0], [0], [1], [0, 0, 1, 1], [], []>} : vector<8x128xbf16>, vector<128x128xbf16>, vector<8x128xf32> -> vector<8x128xf32>
    %28 = vector.broadcast %4 : vector<1x128xf32> to vector<8x128xf32>
    %29 = arith.addf %27, %28 : vector<8x128xf32>
    %cst_11 = arith.constant 0.000000e+00 : f32
    %30 = vector.broadcast %cst_11 : f32 to vector<8x128xf32>
    %31 = arith.maximumf %29, %30 : vector<8x128xf32>
    %32 = arith.truncf %31 : vector<8x128xf32> to vector<8x128xbf16>
    %c0_12 = arith.constant 0 : index
    %c0_13 = arith.constant 0 : index
    %33 = vector.load %arg3[%c0_12, %c0_13] : memref<128x256xbf16, #tpu.memory_space<vmem>>, vector<128x256xbf16>
    %cst_14 = arith.constant dense<0.000000e+00> : vector<8x256xf32>
    %34 = tpu.matmul %32, %33, %cst_14 {dimension_numbers = #tpu.dot_dimension_numbers<[1], [0], [0], [1], [0, 0, 1, 1], [], []>} : vector<8x128xbf16>, vector<128x256xbf16>, vector<8x256xf32> -> vector<8x256xf32>
    %35 = vector.broadcast %5 : vector<1x256xf32> to vector<8x256xf32>
    %36 = arith.addf %34, %35 : vector<8x256xf32>
    %cst_15 = arith.constant 0.000000e+00 : f32
    %37 = vector.broadcast %cst_15 : f32 to vector<8x256xf32>
    %38 = arith.maximumf %36, %37 : vector<8x256xf32>
    %39 = arith.mulf %38, %38 : vector<8x256xf32>
    %cst_16 = arith.constant dense<0.000000e+00> : vector<8xf32>
    %40 = vector.multi_reduction <add>, %39, %cst_16 [1] : vector<8x256xf32> to vector<8xf32>
    %41 = vector.shape_cast %40 : vector<8xf32> to vector<8x1xf32>
    %42 = arith.truncf %38 : vector<8x256xf32> to vector<8x256xbf16>
    %c0_17 = arith.constant 0 : index
    %c0_18 = arith.constant 0 : index
    %43 = vector.load %arg4[%c0_17, %c0_18] : memref<256x256xbf16, #tpu.memory_space<vmem>>, vector<256x256xbf16>
    %cst_19 = arith.constant dense<0.000000e+00> : vector<8x256xf32>
    %44 = tpu.matmul %42, %43, %cst_19 {dimension_numbers = #tpu.dot_dimension_numbers<[1], [0], [0], [1], [0, 0, 1, 1], [], []>} : vector<8x256xbf16>, vector<256x256xbf16>, vector<8x256xf32> -> vector<8x256xf32>
    %45 = arith.mulf %44, %44 : vector<8x256xf32>
    %46 = vector.extract_strided_slice %45 {offsets = [0, 0], sizes = [8, 128], strides = [1, 1]} : vector<8x256xf32> to vector<8x128xf32>
    %cst_20 = arith.constant dense<0.000000e+00> : vector<8xf32>
    %47 = vector.multi_reduction <add>, %46, %cst_20 [1] : vector<8x128xf32> to vector<8xf32>
    %48 = vector.shape_cast %47 : vector<8xf32> to vector<8x1xf32>
    %49 = vector.extract_strided_slice %45 {offsets = [0, 128], sizes = [8, 128], strides = [1, 1]} : vector<8x256xf32> to vector<8x128xf32>
    %cst_21 = arith.constant dense<0.000000e+00> : vector<8xf32>
    %50 = vector.multi_reduction <add>, %49, %cst_21 [1] : vector<8x128xf32> to vector<8xf32>
    %51 = vector.shape_cast %50 : vector<8xf32> to vector<8x1xf32>
    %52 = arith.subf %48, %51 : vector<8x1xf32>
    %cst_22 = arith.constant 1.000000e-24 : f32
    %53 = vector.broadcast %cst_22 : f32 to vector<8x1xf32>
    %54 = arith.maximumf %41, %53 : vector<8x1xf32>
    %55 = tpu.reciprocal %54 {approx = true} : vector<8x1xf32> -> vector<8x1xf32>
    %56 = arith.mulf %52, %55 : vector<8x1xf32>
    %57 = vector.broadcast %56 : vector<8x1xf32> to vector<8x256xf32>
    %58 = vector.broadcast %6 : vector<1x256xf32> to vector<8x256xf32>
    %59 = arith.mulf %57, %58 : vector<8x256xf32>
    %60 = vector.broadcast %7 : vector<1x256xf32> to vector<8x256xf32>
    %61 = arith.addf %59, %60 : vector<8x256xf32>
    %cst_23 = arith.constant 0.000000e+00 : f32
    %62 = vector.broadcast %cst_23 : f32 to vector<8x256xf32>
    %63 = arith.maximumf %61, %62 : vector<8x256xf32>
    %64 = arith.truncf %63 : vector<8x256xf32> to vector<8x256xbf16>
    %c512 = arith.constant 512 : index
    %c0_24 = arith.constant 0 : index
    %65 = vector.load %arg2[%c512, %c0_24] : memref<896x128xbf16, #tpu.memory_space<vmem>>, vector<256x128xbf16>
    %cst_25 = arith.constant dense<0.000000e+00> : vector<8x128xf32>
    %66 = tpu.matmul %64, %65, %cst_25 {dimension_numbers = #tpu.dot_dimension_numbers<[1], [0], [0], [1], [0, 0, 1, 1], [], []>} : vector<8x256xbf16>, vector<256x128xbf16>, vector<8x128xf32> -> vector<8x128xf32>
    %67 = vector.broadcast %8 : vector<1x128xf32> to vector<8x128xf32>
    %68 = arith.addf %66, %67 : vector<8x128xf32>
    %cst_26 = arith.constant 0.000000e+00 : f32
    %69 = vector.broadcast %cst_26 : f32 to vector<8x128xf32>
    %70 = arith.maximumf %68, %69 : vector<8x128xf32>
    %71 = arith.truncf %70 : vector<8x128xf32> to vector<8x128xbf16>
    %c768 = arith.constant 768 : index
    %c0_27 = arith.constant 0 : index
    %72 = vector.load %arg2[%c768, %c0_27] : memref<896x128xbf16, #tpu.memory_space<vmem>>, vector<128x128xbf16>
    %cst_28 = arith.constant dense<0.000000e+00> : vector<8x128xf32>
    %73 = tpu.matmul %71, %72, %cst_28 {dimension_numbers = #tpu.dot_dimension_numbers<[1], [0], [0], [1], [0, 0, 1, 1], [], []>} : vector<8x128xbf16>, vector<128x128xbf16>, vector<8x128xf32> -> vector<8x128xf32>
    %74 = vector.broadcast %9 : vector<1x128xf32> to vector<8x128xf32>
    %75 = arith.addf %73, %74 : vector<8x128xf32>
    %cst_29 = arith.constant 0.000000e+00 : f32
    %76 = vector.broadcast %cst_29 : f32 to vector<8x128xf32>
    %77 = arith.maximumf %75, %76 : vector<8x128xf32>
    %78 = vector.broadcast %10 : vector<1x128xf32> to vector<8x128xf32>
    %79 = arith.mulf %77, %78 : vector<8x128xf32>
    %cst_30 = arith.constant dense<0.000000e+00> : vector<8xf32>
    %80 = vector.multi_reduction <add>, %79, %cst_30 [1] : vector<8x128xf32> to vector<8xf32>
    %81 = vector.shape_cast %80 : vector<8xf32> to vector<8x1xf32>
    %82 = vector.broadcast %11 : vector<1x1xf32> to vector<8x1xf32>
    %83 = arith.addf %81, %82 : vector<8x1xf32>
    %cst_31 = arith.constant 0.000000e+00 : f32
    %84 = vector.broadcast %cst_31 : f32 to vector<8x1xf32>
    %85 = arith.subf %84, %83 : vector<8x1xf32>
    %86 = math.exp %85 : vector<8x1xf32>
    %cst_32 = arith.constant 1.000000e+00 : f32
    %87 = vector.broadcast %cst_32 : f32 to vector<8x1xf32>
    %88 = arith.addf %87, %86 : vector<8x1xf32>
    %cst_33 = arith.constant 1.000000e+00 : f32
    %89 = vector.broadcast %cst_33 : f32 to vector<8x1xf32>
    %90 = arith.divf %89, %88 : vector<8x1xf32>
    %c0_34 = arith.constant 0 : index
    %c0_35 = arith.constant 0 : index
    %91 = vector.load %arg6[%c0_34, %c0_35] : memref<8x1xf32, #tpu.memory_space<vmem>>, vector<8x1xf32>
    tpu.vector_store %arg6[%c0_34, %c0_35], %90 {strides = array<i32>} : memref<8x1xf32, #tpu.memory_space<vmem>>, vector<8x1xf32>,
    return
  }
  func.func @transform_0(%arg0: i32) -> (i32, i32) {
    %c0_i32 = arith.constant 0 : i32
    %c0_i32_0 = arith.constant 0 : i32
    return %arg0, %c0_i32 : i32, i32
  }
  func.func @transform_1(%arg0: i32) -> (i32, i32) {
    %c0_i32 = arith.constant 0 : i32
    %c0_i32_0 = arith.constant 0 : i32
    %c0_i32_1 = arith.constant 0 : i32
    return %c0_i32, %c0_i32_0 : i32, i32
  }
  func.func @transform_2(%arg0: i32) -> (i32, i32) {
    %c0_i32 = arith.constant 0 : i32
    %c0_i32_0 = arith.constant 0 : i32
    %c0_i32_1 = arith.constant 0 : i32
    return %c0_i32, %c0_i32_0 : i32, i32
  }
  func.func @transform_3(%arg0: i32) -> (i32, i32) {
    %c0_i32 = arith.constant 0 : i32
    %c0_i32_0 = arith.constant 0 : i32
    %c0_i32_1 = arith.constant 0 : i32
    return %c0_i32, %c0_i32_0 : i32, i32
  }
  func.func @transform_4(%arg0: i32) -> (i32, i32) {
    %c0_i32 = arith.constant 0 : i32
    %c0_i32_0 = arith.constant 0 : i32
    %c0_i32_1 = arith.constant 0 : i32
    return %c0_i32, %c0_i32_0 : i32, i32
  }
  func.func @transform_5(%arg0: i32) -> (i32, i32) {
    %c0_i32 = arith.constant 0 : i32
    %c0_i32_0 = arith.constant 0 : i32
    return %arg0, %c0_i32 : i32, i32
  }
}

</mosaic_0001>

<llo_original>
// kernel: model_forward.1
$region0: #{model_forward.1}
  #allocation0 [shape = 'u32[]', space=smem, size = 0x4, offset = 0x4, fixed_abs, tag = 'smem constant byte address 0x4 - core index']
  #allocation1 [shape = 'u32[144,128]{1,0:T(1,128)}', space=vmem, size = 0x12000, scoped, tag = 'internal scratch']
  %s0 = inlined_call_operand.vmem [shape: bf16[8,256], index: 0, kind: input, shape index: {}]
  %s1 = inlined_call_operand.hbm [shape: bf16[896,128], index: 1, kind: input, shape index: {}]
  %s2 = inlined_call_operand.hbm [shape: bf16[128,256], index: 2, kind: input, shape index: {}]
  %s3 = inlined_call_operand.hbm [shape: bf16[256,256], index: 3, kind: input, shape index: {}]
  %s4 = inlined_call_operand.vmem [shape: f32[16,256], index: 4, kind: input, shape index: {}]
  %s5 = inlined_call_operand.vmem [shape: f32[8,1], index: 5, kind: output, shape index: {}]
  %s6 = sld [smem:[#allocation0]]
  $region42: #{model_forward.1} parent=0
    _
  %s8 = ssub.s32 1, %s6
  %s9 = scalar_select 0, %s8, %s6
  $region1: #{model_forward.1} parent=0
    #allocation2 [shape = 'u8[229376]{0}', space=vmem, size = 0x38000, scoped, tag = 'input window, operand 1, single buffered']
    #allocation3 [shape = 's32[1]{0}', space=sflag, size = 0x4, scoped, tag = 'scoped memory for model_forward.1']
    #allocation4 [shape = 'u8[65536]{0}', space=vmem, size = 0x10000, scoped, tag = 'input window, operand 2, single buffered']
    #allocation5 [shape = 's32[1]{0}', space=sflag, size = 0x4, scoped, tag = 'scoped memory for model_forward.1']
    #allocation6 [shape = 'u8[131072]{0}', space=vmem, size = 0x20000, scoped, tag = 'input window, operand 3, single buffered']
    %10 = vsyncpa [#allocation3], 0
    %11 = vsyncpa [#allocation5], 0
    // Predicated region
    $region2: #{model_forward.1} parent=1 // pred_check
      _
    $region3: #{model_forward.1} parent=1 // pred_check_branch
      %13 = sbr.rel (0) target = $region5
    $region4: #{model_forward.1} parent=1 // pred_region
      _
    $region5: #{model_forward.1} parent=1 // pred_fallthru
      _
    // Predicated region
    $region6: #{model_forward.1} parent=1 // pred_check
      _
    $region7: #{model_forward.1} parent=1 // pred_check_branch
      %15 = sbr.rel (0) target = $region9
    $region8: #{model_forward.1} parent=1 // pred_region
      %s17 = ssub.s32 7168, 7168
      %18 = vsyncadd [#allocation3], %s17
      %s19 = sshll.u32 [#allocation2], 4
      %s20 = int_to_ptr.vmem [resolvable:$true] %s19
      %25 = dma.hbm_to_vmem [thread:$0]  %s1, 7168, %s20, [#allocation3], 64, 64, 4
    $region9: #{model_forward.1} parent=1 // pred_fallthru
      _
    // Predicated region
    $region10: #{model_forward.1} parent=1 // pred_check
      _
    $region11: #{model_forward.1} parent=1 // pred_check_branch
      %27 = sbr.rel (0) target = $region13
    $region12: #{model_forward.1} parent=1 // pred_region
      %s29 = ssub.s32 2048, 2048
      %30 = vsyncadd [#allocation5], %s29
      %s31 = sshll.u32 [#allocation4], 4
      %s32 = int_to_ptr.vmem [resolvable:$true] %s31
      %37 = dma.hbm_to_vmem [thread:$0]  %s2, 2048, %s32, [#allocation5], 128, 128, 8
    $region13: #{model_forward.1} parent=1 // pred_fallthru
      _
    // Predicated region
    $region14: #{model_forward.1} parent=1 // pred_check
      _
    $region15: #{model_forward.1} parent=1 // pred_check_branch
      %39 = sbr.rel (0) target = $region17
    $region16: #{model_forward.1} parent=1 // pred_region
      %s41 = ssub.s32 4096, 4096
      %42 = vsyncadd [#allocation5], %s41
      %s43 = sshll.u32 [#allocation6], 4
      %s44 = int_to_ptr.vmem [resolvable:$true] %s43
      %49 = dma.hbm_to_vmem [thread:$0]  %s3, 4096, %s44, [#allocation5], 128, 128, 8
    $region17: #{model_forward.1} parent=1 // pred_fallthru
      _
    // Predicated region
    $region18: #{model_forward.1} parent=1 // pred_check
      _
    $region19: #{model_forward.1} parent=1 // pred_check_branch
      %51 = sbr.rel (0) target = $region21
    $region20: #{model_forward.1} parent=1 // pred_region
      _
    $region21: #{model_forward.1} parent=1 // pred_fallthru
      _
    // Predicated region
    $region22: #{model_forward.1} parent=1 // pred_check
      _
    $region23: #{model_forward.1} parent=1 // pred_check_branch
      %53 = sbr.rel (0) target = $region25
    $region24: #{model_forward.1} parent=1 // pred_region
      %54 = dma.done [#allocation3], 7168
    $region25: #{model_forward.1} parent=1 // pred_fallthru
      _
    // Predicated region
    $region26: #{model_forward.1} parent=1 // pred_check
      _
    $region27: #{model_forward.1} parent=1 // pred_check_branch
      %56 = sbr.rel (0) target = $region29
    $region28: #{model_forward.1} parent=1 // pred_region
      %57 = dma.done [#allocation5], 2048
    $region29: #{model_forward.1} parent=1 // pred_fallthru
      _
    // Predicated region
    $region30: #{model_forward.1} parent=1 // pred_check
      _
    $region31: #{model_forward.1} parent=1 // pred_check_branch
      %59 = sbr.rel (0) target = $region33
    $region32: #{model_forward.1} parent=1 // pred_region
      %60 = dma.done [#allocation5], 4096
    $region33: #{model_forward.1} parent=1 // pred_fallthru
      _
    %v62 = vld [vmem:[%s0] sm:$0xff]
    %v63 = vld [vmem:[%s4] sm:$0xff]
    %v64 = vld [vmem:[%s4 + $0x8] sm:$0xff]
    %v65 = vld [vmem:[%s4 + $0x10] sm:$0xff]
    %v66 = vld [vmem:[#allocation2] sm:$0xf]
    %v67 = vld [vmem:[#allocation2 + $0x4] sm:$0xf]
    %v68 = vld [vmem:[#allocation2 + $0x8] sm:$0xf]
    %v69 = vld [vmem:[#allocation2 + $0xc] sm:$0xf]
    %v70 = vld [vmem:[#allocation2 + $0x10] sm:$0xf]
    %v71 = vld [vmem:[#allocation2 + $0x14] sm:$0xf]
    %v72 = vld [vmem:[#allocation2 + $0x18] sm:$0xf]
    %v73 = vld [vmem:[#allocation2 + $0x1c] sm:$0xf]
    %v74 = vld [vmem:[#allocation2 + $0x20] sm:$0xf]
    %v75 = vld [vmem:[#allocation2 + $0x24] sm:$0xf]
    %v76 = vld [vmem:[#allocation2 + $0x28] sm:$0xf]
    %v77 = vld [vmem:[#allocation2 + $0x2c] sm:$0xf]
    %v78 = vld [vmem:[#allocation2 + $0x30] sm:$0xf]
    %v79 = vld [vmem:[#allocation2 + $0x34] sm:$0xf]
    %v80 = vld [vmem:[#allocation2 + $0x38] sm:$0xf]
    %v81 = vld [vmem:[#allocation2 + $0x3c] sm:$0xf]
    %v82 = vld [vmem:[#allocation2 + $0x40] sm:$0xf]
    %v83 = vld [vmem:[#allocation2 + $0x44] sm:$0xf]
    %v84 = vld [vmem:[#allocation2 + $0x48] sm:$0xf]
    %v85 = vld [vmem:[#allocation2 + $0x4c] sm:$0xf]
    %v86 = vld [vmem:[#allocation2 + $0x50] sm:$0xf]
    %v87 = vld [vmem:[#allocation2 + $0x54] sm:$0xf]
    %v88 = vld [vmem:[#allocation2 + $0x58] sm:$0xf]
    %v89 = vld [vmem:[#allocation2 + $0x5c] sm:$0xf]
    %v90 = vld [vmem:[#allocation2 + $0x60] sm:$0xf]
    %v91 = vld [vmem:[#allocation2 + $0x64] sm:$0xf]
    %v92 = vld [vmem:[#allocation2 + $0x68] sm:$0xf]
    %v93 = vld [vmem:[#allocation2 + $0x6c] sm:$0xf]
    %v94 = vld [vmem:[#allocation2 + $0x70] sm:$0xf]
    %v95 = vld [vmem:[#allocation2 + $0x74] sm:$0xf]
    %v96 = vld [vmem:[#allocation2 + $0x78] sm:$0xf]
    %v97 = vld [vmem:[#allocation2 + $0x7c] sm:$0xf]
    %v98 = vlaneseq
    %v99 = vshrl.u32 %v98, 7
    %v100 = vsub.s32 0, %v99
    %v101 = vrot.slane %v63, %v100
    %v103 = vunpack.c.l.b16 %v62
    %v104 = vunpack.c.h.b16 %v62
    %v105 = vpack.c.b16 %v103, %v103
    %v106 = vpack.c.b16 %v104, %v104
    %v141 = vunpack.c.l.b16 %v66
    %v142 = vunpack.c.l.b16 %v67
    %v143 = vunpack.c.l.b16 %v68
    %v144 = vunpack.c.l.b16 %v69
    %v145 = vunpack.c.l.b16 %v70
    %v146 = vunpack.c.l.b16 %v71
    %v147 = vunpack.c.l.b16 %v72
    %v148 = vunpack.c.l.b16 %v73
    %v149 = vunpack.c.l.b16 %v74
    %v150 = vunpack.c.l.b16 %v75
    %v151 = vunpack.c.l.b16 %v76
    %v152 = vunpack.c.l.b16 %v77
    %v153 = vunpack.c.l.b16 %v78
    %v154 = vunpack.c.l.b16 %v79
    %v155 = vunpack.c.l.b16 %v80
    %v156 = vunpack.c.l.b16 %v81
    %v157 = vunpack.c.l.b16 %v82
    %v158 = vunpack.c.l.b16 %v83
    %v159 = vunpack.c.l.b16 %v84
    %v160 = vunpack.c.l.b16 %v85
    %v161 = vunpack.c.l.b16 %v86
    %v162 = vunpack.c.l.b16 %v87
    %v163 = vunpack.c.l.b16 %v88
    %v164 = vunpack.c.l.b16 %v89
    %v165 = vunpack.c.l.b16 %v90
    %v166 = vunpack.c.l.b16 %v91
    %v167 = vunpack.c.l.b16 %v92
    %v168 = vunpack.c.l.b16 %v93
    %v169 = vunpack.c.l.b16 %v94
    %v170 = vunpack.c.l.b16 %v95
    %v171 = vunpack.c.l.b16 %v96
    %v172 = vunpack.c.l.b16 %v97
    %v173 = vpack.c.b16 %v142, %v141
    %v174 = vpack.c.b16 %v144, %v143
    %v175 = vpack.c.b16 %v146, %v145
    %v176 = vpack.c.b16 %v148, %v147
    %v177 = vpack.c.b16 %v150, %v149
    %v178 = vpack.c.b16 %v152, %v151
    %v179 = vpack.c.b16 %v154, %v153
    %v180 = vpack.c.b16 %v156, %v155
    %v181 = vpack.c.b16 %v158, %v157
    %v182 = vpack.c.b16 %v160, %v159
    %v183 = vpack.c.b16 %v162, %v161
    %v184 = vpack.c.b16 %v164, %v163
    %v185 = vpack.c.b16 %v166, %v165
    %v186 = vpack.c.b16 %v168, %v167
    %v187 = vpack.c.b16 %v170, %v169
    %v188 = vpack.c.b16 %v172, %v171
    %205 = vmatprep.subr.bf16.mxu0 0
    %206 = vmatpush1.bf16.msra.mxu0 %v180
    %207 = vmatprep.subr.bf16.mxu0 0
    %208 = vmatpush1.bf16.msra.mxu0 %v179
    %209 = vmatprep.subr.bf16.mxu0 0
    %210 = vmatpush1.bf16.msra.mxu0 %v178
    %211 = vmatprep.subr.bf16.mxu0 0
    %212 = vmatpush1.bf16.msra.mxu0 %v177
    %213 = vmatprep.subr.bf16.mxu0 0
    %214 = vmatpush1.bf16.msra.mxu0 %v176
    %215 = vmatprep.subr.bf16.mxu0 0
    %216 = vmatpush1.bf16.msra.mxu0 %v175
    %217 = vmatprep.subr.bf16.mxu0 0
    %218 = vmatpush1.bf16.msra.mxu0 %v174
    %219 = vmatprep.subr.bf16.mxu0 0
    %220 = vmatpush1.bf16.msra.mxu0 %v173
    %221 = vmatprep.subr.bf16.mxu0 0
    %222 = vmatpush2.bf16.msra.mxu0 %v188
    %223 = vmatprep.subr.bf16.mxu0 0
    %224 = vmatpush2.bf16.msra.mxu0 %v187
    %225 = vmatprep.subr.bf16.mxu0 0
    %226 = vmatpush2.bf16.msra.mxu0 %v186
    %227 = vmatprep.subr.bf16.mxu0 0
    %228 = vmatpush2.bf16.msra.mxu0 %v185
    %229 = vmatprep.subr.bf16.mxu0 0
    %230 = vmatpush2.bf16.msra.mxu0 %v184
    %231 = vmatprep.subr.bf16.mxu0 0
    %232 = vmatpush2.bf16.msra.mxu0 %v183
    %233 = vmatprep.subr.bf16.mxu0 0
    %234 = vmatpush2.bf16.msra.mxu0 %v182
    %235 = vmatprep.subr.bf16.mxu0 0
    %236 = vmatpush2.bf16.msra.mxu0 %v181
    %237 = vmatprep.mubr.bf16.mxu0 %v106
    %238 = vmatmul.mubr.bf16.gmra.mxu0 %v105
    %v239 = vpop.f32.mrf.mxu0
    %v240 = vadd.f32 %v101, %v239
    %v241 = vpop.f32.mrf.mxu0
    %v242 = vpop.f32.mrf.mxu0
    %v243 = vpop.f32.mrf.mxu0
    %244 = vdwg.mxu0
    %v245 = vmax.f32 %v240, 0.0
    %v246 = vpack.c.bf16 %v245, %v245
    %v247 = vld [vmem:[#allocation2 + $0x80] sm:$0xf]
    %v248 = vld [vmem:[#allocation2 + $0x84] sm:$0xf]
    %v249 = vld [vmem:[#allocation2 + $0x88] sm:$0xf]
    %v250 = vld [vmem:[#allocation2 + $0x8c] sm:$0xf]
    %v251 = vld [vmem:[#allocation2 + $0x90] sm:$0xf]
    %v252 = vld [vmem:[#allocation2 + $0x94] sm:$0xf]
    %v253 = vld [vmem:[#allocation2 + $0x98] sm:$0xf]
    %v254 = vld [vmem:[#allocation2 + $0x9c] sm:$0xf]
    %v255 = vld [vmem:[#allocation2 + $0xa0] sm:$0xf]
    %v256 = vld [vmem:[#allocation2 + $0xa4] sm:$0xf]
    %v257 = vld [vmem:[#allocation2 + $0xa8] sm:$0xf]
    %v258 = vld [vmem:[#allocation2 + $0xac] sm:$0xf]
    %v259 = vld [vmem:[#allocation2 + $0xb0] sm:$0xf]
    %v260 = vld [vmem:[#allocation2 + $0xb4] sm:$0xf]
    %v261 = vld [vmem:[#allocation2 + $0xb8] sm:$0xf]
    %v262 = vld [vmem:[#allocation2 + $0xbc] sm:$0xf]
    %v263 = vlaneseq
    %v264 = vshrl.u32 %v263, 7
    %v265 = vsub.s32 1, %v264
    %v266 = vrot.slane %v63, %v265
    %v283 = vunpack.c.l.b16 %v247
    %v284 = vunpack.c.l.b16 %v248
    %v285 = vunpack.c.l.b16 %v249
    %v286 = vunpack.c.l.b16 %v250
    %v287 = vunpack.c.l.b16 %v251
    %v288 = vunpack.c.l.b16 %v252
    %v289 = vunpack.c.l.b16 %v253
    %v290 = vunpack.c.l.b16 %v254
    %v291 = vunpack.c.l.b16 %v255
    %v292 = vunpack.c.l.b16 %v256
    %v293 = vunpack.c.l.b16 %v257
    %v294 = vunpack.c.l.b16 %v258
    %v295 = vunpack.c.l.b16 %v259
    %v296 = vunpack.c.l.b16 %v260
    %v297 = vunpack.c.l.b16 %v261
    %v298 = vunpack.c.l.b16 %v262
    %v299 = vpack.c.b16 %v284, %v283
    %v300 = vpack.c.b16 %v286, %v285
    %v301 = vpack.c.b16 %v288, %v287
    %v302 = vpack.c.b16 %v290, %v289
    %v303 = vpack.c.b16 %v292, %v291
    %v304 = vpack.c.b16 %v294, %v293
    %v305 = vpack.c.b16 %v296, %v295
    %v306 = vpack.c.b16 %v298, %v297
    %315 = vmatprep.subr.bf16.mxu0 0
    %316 = vmatpush1.bf16.msra.mxu0 %v306
    %317 = vmatprep.subr.bf16.mxu0 0
    %318 = vmatpush1.bf16.msra.mxu0 %v305
    %319 = vmatprep.subr.bf16.mxu0 0
    %320 = vmatpush1.bf16.msra.mxu0 %v304
    %321 = vmatprep.subr.bf16.mxu0 0
    %322 = vmatpush1.bf16.msra.mxu0 %v303
    %323 = vmatprep.subr.bf16.mxu0 0
    %324 = vmatpush1.bf16.msra.mxu0 %v302
    %325 = vmatprep.subr.bf16.mxu0 0
    %326 = vmatpush1.bf16.msra.mxu0 %v301
    %327 = vmatprep.subr.bf16.mxu0 0
    %328 = vmatpush1.bf16.msra.mxu0 %v300
    %329 = vmatprep.subr.bf16.mxu0 0
    %330 = vmatpush1.bf16.msra.mxu0 %v299
    %331 = vmatprep.subr.bf16.mxu0 0
    %332 = vmatpush2.bf16.msra.mxu0 0
    %333 = vmatprep.subr.bf16.mxu0 0
    %334 = vmatpush2.bf16.msra.mxu0 0
    %335 = vmatprep.subr.bf16.mxu0 0
    %336 = vmatpush2.bf16.msra.mxu0 0
    %337 = vmatprep.subr.bf16.mxu0 0
    %338 = vmatpush2.bf16.msra.mxu0 0
    %339 = vmatprep.subr.bf16.mxu0 0
    %340 = vmatpush2.bf16.msra.mxu0 0
    %341 = vmatprep.subr.bf16.mxu0 0
    %342 = vmatpush2.bf16.msra.mxu0 0
    %343 = vmatprep.subr.bf16.mxu0 0
    %344 = vmatpush2.bf16.msra.mxu0 0
    %345 = vmatprep.subr.bf16.mxu0 0
    %346 = vmatpush2.bf16.msra.mxu0 0
    %347 = vmatprep.mubr.bf16.mxu0 0
    %348 = vmatmul.mubr.bf16.gmra.mxu0 %v246
    %v349 = vpop.f32.mrf.mxu0
    %v350 = vadd.f32 %v266, %v349
    %v351 = vpop.f32.mrf.mxu0
    %v352 = vpop.f32.mrf.mxu0
    %v353 = vpop.f32.mrf.mxu0
    %354 = vdwg.mxu0
    %v355 = vmax.f32 %v350, 0.0
    %v356 = vpack.c.bf16 %v355, %v355
    %v357 = vld [vmem:[#allocation2 + $0xc0] sm:$0xf]
    %v358 = vld [vmem:[#allocation2 + $0xc4] sm:$0xf]
    %v359 = vld [vmem:[#allocation2 + $0xc8] sm:$0xf]
    %v360 = vld [vmem:[#allocation2 + $0xcc] sm:$0xf]
    %v361 = vld [vmem:[#allocation2 + $0xd0] sm:$0xf]
    %v362 = vld [vmem:[#allocation2 + $0xd4] sm:$0xf]
    %v363 = vld [vmem:[#allocation2 + $0xd8] sm:$0xf]
    %v364 = vld [vmem:[#allocation2 + $0xdc] sm:$0xf]
    %v365 = vld [vmem:[#allocation2 + $0xe0] sm:$0xf]
    %v366 = vld [vmem:[#allocation2 + $0xe4] sm:$0xf]
    %v367 = vld [vmem:[#allocation2 + $0xe8] sm:$0xf]
    %v368 = vld [vmem:[#allocation2 + $0xec] sm:$0xf]
    %v369 = vld [vmem:[#allocation2 + $0xf0] sm:$0xf]
    %v370 = vld [vmem:[#allocation2 + $0xf4] sm:$0xf]
    %v371 = vld [vmem:[#allocation2 + $0xf8] sm:$0xf]
    %v372 = vld [vmem:[#allocation2 + $0xfc] sm:$0xf]
    %v373 = vlaneseq
    %v374 = vshrl.u32 %v373, 7
    %v375 = vsub.s32 2, %v374
    %v376 = vrot.slane %v63, %v375
    %v393 = vunpack.c.l.b16 %v357
    %v394 = vunpack.c.l.b16 %v358
    %v395 = vunpack.c.l.b16 %v359
    %v396 = vunpack.c.l.b16 %v360
    %v397 = vunpack.c.l.b16 %v361
    %v398 = vunpack.c.l.b16 %v362
    %v399 = vunpack.c.l.b16 %v363
    %v400 = vunpack.c.l.b16 %v364
    %v401 = vunpack.c.l.b16 %v365
    %v402 = vunpack.c.l.b16 %v366
    %v403 = vunpack.c.l.b16 %v367
    %v404 = vunpack.c.l.b16 %v368
    %v405 = vunpack.c.l.b16 %v369
    %v406 = vunpack.c.l.b16 %v370
    %v407 = vunpack.c.l.b16 %v371
    %v408 = vunpack.c.l.b16 %v372
    %v409 = vpack.c.b16 %v394, %v393
    %v410 = vpack.c.b16 %v396, %v395
    %v411 = vpack.c.b16 %v398, %v397
    %v412 = vpack.c.b16 %v400, %v399
    %v413 = vpack.c.b16 %v402, %v401
    %v414 = vpack.c.b16 %v404, %v403
    %v415 = vpack.c.b16 %v406, %v405
    %v416 = vpack.c.b16 %v408, %v407
    %425 = vmatprep.subr.bf16.mxu0 0
    %426 = vmatpush1.bf16.msra.mxu0 %v416
    %427 = vmatprep.subr.bf16.mxu0 0
    %428 = vmatpush1.bf16.msra.mxu0 %v415
    %429 = vmatprep.subr.bf16.mxu0 0
    %430 = vmatpush1.bf16.msra.mxu0 %v414
    %431 = vmatprep.subr.bf16.mxu0 0
    %432 = vmatpush1.bf16.msra.mxu0 %v413
    %433 = vmatprep.subr.bf16.mxu0 0
    %434 = vmatpush1.bf16.msra.mxu0 %v412
    %435 = vmatprep.subr.bf16.mxu0 0
    %436 = vmatpush1.bf16.msra.mxu0 %v411
    %437 = vmatprep.subr.bf16.mxu0 0
    %438 = vmatpush1.bf16.msra.mxu0 %v410
    %439 = vmatprep.subr.bf16.mxu0 0
    %440 = vmatpush1.bf16.msra.mxu0 %v409
    %441 = vmatprep.subr.bf16.mxu0 0
    %442 = vmatpush2.bf16.msra.mxu0 0
    %443 = vmatprep.subr.bf16.mxu0 0
    %444 = vmatpush2.bf16.msra.mxu0 0
    %445 = vmatprep.subr.bf16.mxu0 0
    %446 = vmatpush2.bf16.msra.mxu0 0
    %447 = vmatprep.subr.bf16.mxu0 0
    %448 = vmatpush2.bf16.msra.mxu0 0
    %449 = vmatprep.subr.bf16.mxu0 0
    %450 = vmatpush2.bf16.msra.mxu0 0
    %451 = vmatprep.subr.bf16.mxu0 0
    %452 = vmatpush2.bf16.msra.mxu0 0
    %453 = vmatprep.subr.bf16.mxu0 0
    %454 = vmatpush2.bf16.msra.mxu0 0
    %455 = vmatprep.subr.bf16.mxu0 0
    %456 = vmatpush2.bf16.msra.mxu0 0
    %457 = vmatprep.mubr.bf16.mxu0 0
    %458 = vmatmul.mubr.bf16.gmra.mxu0 %v356
    %v459 = vpop.f32.mrf.mxu0
    %v460 = vadd.f32 %v376, %v459
    %v461 = vpop.f32.mrf.mxu0
    %v462 = vpop.f32.mrf.mxu0
    %v463 = vpop.f32.mrf.mxu0
    %464 = vdwg.mxu0
    %v465 = vmax.f32 %v460, 0.0
    %v466 = vpack.c.bf16 %v465, %v465
    %v467 = vld [vmem:[#allocation4] sm:$0xff]
    %v468 = vld [vmem:[#allocation4 + $0x8] sm:$0xff]
    %v469 = vld [vmem:[#allocation4 + $0x10] sm:$0xff]
    %v470 = vld [vmem:[#allocation4 + $0x18] sm:$0xff]
    %v471 = vld [vmem:[#allocation4 + $0x20] sm:$0xff]
    %v472 = vld [vmem:[#allocation4 + $0x28] sm:$0xff]
    %v473 = vld [vmem:[#allocation4 + $0x30] sm:$0xff]
    %v474 = vld [vmem:[#allocation4 + $0x38] sm:$0xff]
    %v475 = vld [vmem:[#allocation4 + $0x40] sm:$0xff]
    %v476 = vld [vmem:[#allocation4 + $0x48] sm:$0xff]
    %v477 = vld [vmem:[#allocation4 + $0x50] sm:$0xff]
    %v478 = vld [vmem:[#allocation4 + $0x58] sm:$0xff]
    %v479 = vld [vmem:[#allocation4 + $0x60] sm:$0xff]
    %v480 = vld [vmem:[#allocation4 + $0x68] sm:$0xff]
    %v481 = vld [vmem:[#allocation4 + $0x70] sm:$0xff]
    %v482 = vld [vmem:[#allocation4 + $0x78] sm:$0xff]
    %v483 = vlaneseq
    %v484 = vshrl.u32 %v483, 7
    %v485 = vsub.s32 3, %v484
    %v486 = vrot.slane %v63, %v485
    %v487 = vlaneseq
    %v488 = vshrl.u32 %v487, 7
    %v489 = vsub.s32 3, %v488
    %v490 = vrot.slane %v64, %v489
    %v507 = vunpack.c.l.b16 %v467
    %v508 = vunpack.c.h.b16 %v467
    %v509 = vunpack.c.l.b16 %v468
    %v510 = vunpack.c.h.b16 %v468
    %v511 = vunpack.c.l.b16 %v469
    %v512 = vunpack.c.h.b16 %v469
    %v513 = vunpack.c.l.b16 %v470
    %v514 = vunpack.c.h.b16 %v470
    %v515 = vunpack.c.l.b16 %v471
    %v516 = vunpack.c.h.b16 %v471
    %v517 = vunpack.c.l.b16 %v472
    %v518 = vunpack.c.h.b16 %v472
    %v519 = vunpack.c.l.b16 %v473
    %v520 = vunpack.c.h.b16 %v473
    %v521 = vunpack.c.l.b16 %v474
    %v522 = vunpack.c.h.b16 %v474
    %v523 = vunpack.c.l.b16 %v475
    %v524 = vunpack.c.h.b16 %v475
    %v525 = vunpack.c.l.b16 %v476
    %v526 = vunpack.c.h.b16 %v476
    %v527 = vunpack.c.l.b16 %v477
    %v528 = vunpack.c.h.b16 %v477
    %v529 = vunpack.c.l.b16 %v478
    %v530 = vunpack.c.h.b16 %v478
    %v531 = vunpack.c.l.b16 %v479
    %v532 = vunpack.c.h.b16 %v479
    %v533 = vunpack.c.l.b16 %v480
    %v534 = vunpack.c.h.b16 %v480
    %v535 = vunpack.c.l.b16 %v481
    %v536 = vunpack.c.h.b16 %v481
    %v537 = vunpack.c.l.b16 %v482
    %v538 = vunpack.c.h.b16 %v482
    %v539 = vpack.c.b16 %v509, %v507
    %v540 = vpack.c.b16 %v510, %v508
    %v541 = vpack.c.b16 %v513, %v511
    %v542 = vpack.c.b16 %v514, %v512
    %v543 = vpack.c.b16 %v517, %v515
    %v544 = vpack.c.b16 %v518, %v516
    %v545 = vpack.c.b16 %v521, %v519
    %v546 = vpack.c.b16 %v522, %v520
    %v547 = vpack.c.b16 %v525, %v523
    %v548 = vpack.c.b16 %v526, %v524
    %v549 = vpack.c.b16 %v529, %v527
    %v550 = vpack.c.b16 %v530, %v528
    %v551 = vpack.c.b16 %v533, %v531
    %v552 = vpack.c.b16 %v534, %v532
    %v553 = vpack.c.b16 %v537, %v535
    %v554 = vpack.c.b16 %v538, %v536
    %571 = vmatprep.subr.bf16.mxu0 %v554
    %572 = vmatpush1.bf16.msra.mxu0 %v553
    %573 = vmatprep.subr.bf16.mxu0 %v552
    %574 = vmatpush1.bf16.msra.mxu0 %v551
    %575 = vmatprep.subr.bf16.mxu0 %v550
    %576 = vmatpush1.bf16.msra.mxu0 %v549
    %577 = vmatprep.subr.bf16.mxu0 %v548
    %578 = vmatpush1.bf16.msra.mxu0 %v547
    %579 = vmatprep.subr.bf16.mxu0 %v546
    %580 = vmatpush1.bf16.msra.mxu0 %v545
    %581 = vmatprep.subr.bf16.mxu0 %v544
    %582 = vmatpush1.bf16.msra.mxu0 %v543
    %583 = vmatprep.subr.bf16.mxu0 %v542
    %584 = vmatpush1.bf16.msra.mxu0 %v541
    %585 = vmatprep.subr.bf16.mxu0 %v540
    %586 = vmatpush1.bf16.msra.mxu0 %v539
    %587 = vmatprep.subr.bf16.mxu0 0
    %588 = vmatpush2.bf16.msra.mxu0 0
    %589 = vmatprep.subr.bf16.mxu0 0
    %590 = vmatpush2.bf16.msra.mxu0 0
    %591 = vmatprep.subr.bf16.mxu0 0
    %592 = vmatpush2.bf16.msra.mxu0 0
    %593 = vmatprep.subr.bf16.mxu0 0
    %594 = vmatpush2.bf16.msra.mxu0 0
    %595 = vmatprep.subr.bf16.mxu0 0
    %596 = vmatpush2.bf16.msra.mxu0 0
    %597 = vmatprep.subr.bf16.mxu0 0
    %598 = vmatpush2.bf16.msra.mxu0 0
    %599 = vmatprep.subr.bf16.mxu0 0
    %600 = vmatpush2.bf16.msra.mxu0 0
    %601 = vmatprep.subr.bf16.mxu0 0
    %602 = vmatpush2.bf16.msra.mxu0 0
    %603 = vmatprep.mubr.bf16.mxu0 0
    %604 = vmatmul.mubr.bf16.gmra.mxu0 %v466
    %v605 = vpop.f32.mrf.mxu0
    %v606 = vadd.f32 %v486, %v605
    %v607 = vpop.f32.mrf.mxu0
    %v608 = vadd.f32 %v490, %v607
    %v609 = vpop.f32.mrf.mxu0
    %v610 = vpop.f32.mrf.mxu0
    %611 = vdwg.mxu0
    %v612 = vmax.f32 %v606, 0.0
    %v613 = vmax.f32 %v608, 0.0
    %v614 = vmul.f32 %v612, %v612
    %v615 = vmul.f32 %v613, %v613
    %v616 = vadd.f32 %v614, %v615
    %617 = vadd.xlane.f32.xlu0 %v616
    %v618 = vpop.xlane.xlu0 %617
    %v619 = vpack.c.bf16 %v612, %v612
    %v620 = vpack.c.bf16 %v613, %v613
    %v621 = vld [vmem:[#allocation6] sm:$0xff]
    %v622 = vld [vmem:[#allocation6 + $0x8] sm:$0xff]
    %v623 = vld [vmem:[#allocation6 + $0x10] sm:$0xff]
    %v624 = vld [vmem:[#allocation6 + $0x18] sm:$0xff]
    %v625 = vld [vmem:[#allocation6 + $0x20] sm:$0xff]
    %v626 = vld [vmem:[#allocation6 + $0x28] sm:$0xff]
    %v627 = vld [vmem:[#allocation6 + $0x30] sm:$0xff]
    %v628 = vld [vmem:[#allocation6 + $0x38] sm:$0xff]
    %v629 = vld [vmem:[#allocation6 + $0x40] sm:$0xff]
    %v630 = vld [vmem:[#allocation6 + $0x48] sm:$0xff]
    %v631 = vld [vmem:[#allocation6 + $0x50] sm:$0xff]
    %v632 = vld [vmem:[#allocation6 + $0x58] sm:$0xff]
    %v633 = vld [vmem:[#allocation6 + $0x60] sm:$0xff]
    %v634 = vld [vmem:[#allocation6 + $0x68] sm:$0xff]
    %v635 = vld [vmem:[#allocation6 + $0x70] sm:$0xff]
    %v636 = vld [vmem:[#allocation6 + $0x78] sm:$0xff]
    %v637 = vld [vmem:[#allocation6 + $0x80] sm:$0xff]
    %v638 = vld [vmem:[#allocation6 + $0x88] sm:$0xff]
    %v639 = vld [vmem:[#allocation6 + $0x90] sm:$0xff]
    %v640 = vld [vmem:[#allocation6 + $0x98] sm:$0xff]
    %v641 = vld [vmem:[#allocation6 + $0xa0] sm:$0xff]
    %v642 = vld [vmem:[#allocation6 + $0xa8] sm:$0xff]
    %v643 = vld [vmem:[#allocation6 + $0xb0] sm:$0xff]
    %v644 = vld [vmem:[#allocation6 + $0xb8] sm:$0xff]
    %v645 = vld [vmem:[#allocation6 + $0xc0] sm:$0xff]
    %v646 = vld [vmem:[#allocation6 + $0xc8] sm:$0xff]
    %v647 = vld [vmem:[#allocation6 + $0xd0] sm:$0xff]
    %v648 = vld [vmem:[#allocation6 + $0xd8] sm:$0xff]
    %v649 = vld [vmem:[#allocation6 + $0xe0] sm:$0xff]
    %v650 = vld [vmem:[#allocation6 + $0xe8] sm:$0xff]
    %v651 = vld [vmem:[#allocation6 + $0xf0] sm:$0xff]
    %v652 = vld [vmem:[#allocation6 + $0xf8] sm:$0xff]
    %v685 = vunpack.c.l.b16 %v621
    %v686 = vunpack.c.h.b16 %v621
    %v687 = vunpack.c.l.b16 %v622
    %v688 = vunpack.c.h.b16 %v622
    %v689 = vunpack.c.l.b16 %v623
    %v690 = vunpack.c.h.b16 %v623
    %v691 = vunpack.c.l.b16 %v624
    %v692 = vunpack.c.h.b16 %v624
    %v693 = vunpack.c.l.b16 %v625
    %v694 = vunpack.c.h.b16 %v625
    %v695 = vunpack.c.l.b16 %v626
    %v696 = vunpack.c.h.b16 %v626
    %v697 = vunpack.c.l.b16 %v627
    %v698 = vunpack.c.h.b16 %v627
    %v699 = vunpack.c.l.b16 %v628
    %v700 = vunpack.c.h.b16 %v628
    %v701 = vunpack.c.l.b16 %v629
    %v702 = vunpack.c.h.b16 %v629
    %v703 = vunpack.c.l.b16 %v630
    %v704 = vunpack.c.h.b16 %v630
    %v705 = vunpack.c.l.b16 %v631
    %v706 = vunpack.c.h.b16 %v631
    %v707 = vunpack.c.l.b16 %v632
    %v708 = vunpack.c.h.b16 %v632
    %v709 = vunpack.c.l.b16 %v633
    %v710 = vunpack.c.h.b16 %v633
    %v711 = vunpack.c.l.b16 %v634
    %v712 = vunpack.c.h.b16 %v634
    %v713 = vunpack.c.l.b16 %v635
    %v714 = vunpack.c.h.b16 %v635
    %v715 = vunpack.c.l.b16 %v636
    %v716 = vunpack.c.h.b16 %v636
    %v717 = vunpack.c.l.b16 %v637
    %v718 = vunpack.c.h.b16 %v637
    %v719 = vunpack.c.l.b16 %v638
    %v720 = vunpack.c.h.b16 %v638
    %v721 = vunpack.c.l.b16 %v639
    %v722 = vunpack.c.h.b16 %v639
    %v723 = vunpack.c.l.b16 %v640
    %v724 = vunpack.c.h.b16 %v640
    %v725 = vunpack.c.l.b16 %v641
    %v726 = vunpack.c.h.b16 %v641
    %v727 = vunpack.c.l.b16 %v642
    %v728 = vunpack.c.h.b16 %v642
    %v729 = vunpack.c.l.b16 %v643
    %v730 = vunpack.c.h.b16 %v643
    %v731 = vunpack.c.l.b16 %v644
    %v732 = vunpack.c.h.b16 %v644
    %v733 = vunpack.c.l.b16 %v645
    %v734 = vunpack.c.h.b16 %v645
    %v735 = vunpack.c.l.b16 %v646
    %v736 = vunpack.c.h.b16 %v646
    %v737 = vunpack.c.l.b16 %v647
    %v738 = vunpack.c.h.b16 %v647
    %v739 = vunpack.c.l.b16 %v648
    %v740 = vunpack.c.h.b16 %v648
    %v741 = vunpack.c.l.b16 %v649
    %v742 = vunpack.c.h.b16 %v649
    %v743 = vunpack.c.l.b16 %v650
    %v744 = vunpack.c.h.b16 %v650
    %v745 = vunpack.c.l.b16 %v651
    %v746 = vunpack.c.h.b16 %v651
    %v747 = vunpack.c.l.b16 %v652
    %v748 = vunpack.c.h.b16 %v652
    %v749 = vpack.c.b16 %v687, %v685
    %v750 = vpack.c.b16 %v688, %v686
    %v751 = vpack.c.b16 %v691, %v689
    %v752 = vpack.c.b16 %v692, %v690
    %v753 = vpack.c.b16 %v695, %v693
    %v754 = vpack.c.b16 %v696, %v694
    %v755 = vpack.c.b16 %v699, %v697
    %v756 = vpack.c.b16 %v700, %v698
    %v757 = vpack.c.b16 %v703, %v701
    %v758 = vpack.c.b16 %v704, %v702
    %v759 = vpack.c.b16 %v707, %v705
    %v760 = vpack.c.b16 %v708, %v706
    %v761 = vpack.c.b16 %v711, %v709
    %v762 = vpack.c.b16 %v712, %v710
    %v763 = vpack.c.b16 %v715, %v713
    %v764 = vpack.c.b16 %v716, %v714
    %v765 = vpack.c.b16 %v719, %v717
    %v766 = vpack.c.b16 %v720, %v718
    %v767 = vpack.c.b16 %v723, %v721
    %v768 = vpack.c.b16 %v724, %v722
    %v769 = vpack.c.b16 %v727, %v725
    %v770 = vpack.c.b16 %v728, %v726
    %v771 = vpack.c.b16 %v731, %v729
    %v772 = vpack.c.b16 %v732, %v730
    %v773 = vpack.c.b16 %v735, %v733
    %v774 = vpack.c.b16 %v736, %v734
    %v775 = vpack.c.b16 %v739, %v737
    %v776 = vpack.c.b16 %v740, %v738
    %v777 = vpack.c.b16 %v743, %v741
    %v778 = vpack.c.b16 %v744, %v742
    %v779 = vpack.c.b16 %v747, %v745
    %v780 = vpack.c.b16 %v748, %v746
    %813 = vmatprep.subr.bf16.mxu0 %v764
    %814 = vmatpush1.bf16.msra.mxu0 %v763
    %815 = vmatprep.subr.bf16.mxu0 %v762
    %816 = vmatpush1.bf16.msra.mxu0 %v761
    %817 = vmatprep.subr.bf16.mxu0 %v760
    %818 = vmatpush1.bf16.msra.mxu0 %v759
    %819 = vmatprep.subr.bf16.mxu0 %v758
    %820 = vmatpush1.bf16.msra.mxu0 %v757
    %821 = vmatprep.subr.bf16.mxu0 %v756
    %822 = vmatpush1.bf16.msra.mxu0 %v755
    %823 = vmatprep.subr.bf16.mxu0 %v754
    %824 = vmatpush1.bf16.msra.mxu0 %v753
    %825 = vmatprep.subr.bf16.mxu0 %v752
    %826 = vmatpush1.bf16.msra.mxu0 %v751
    %827 = vmatprep.subr.bf16.mxu0 %v750
    %828 = vmatpush1.bf16.msra.mxu0 %v749
    %829 = vmatprep.subr.bf16.mxu0 %v780
    %830 = vmatpush2.bf16.msra.mxu0 %v779
    %831 = vmatprep.subr.bf16.mxu0 %v778
    %832 = vmatpush2.bf16.msra.mxu0 %v777
    %833 = vmatprep.subr.bf16.mxu0 %v776
    %834 = vmatpush2.bf16.msra.mxu0 %v775
    %835 = vmatprep.subr.bf16.mxu0 %v774
    %836 = vmatpush2.bf16.msra.mxu0 %v773
    %837 = vmatprep.subr.bf16.mxu0 %v772
    %838 = vmatpush2.bf16.msra.mxu0 %v771
    %839 = vmatprep.subr.bf16.mxu0 %v770
    %840 = vmatpush2.bf16.msra.mxu0 %v769
    %841 = vmatprep.subr.bf16.mxu0 %v768
    %842 = vmatpush2.bf16.msra.mxu0 %v767
    %843 = vmatprep.subr.bf16.mxu0 %v766
    %844 = vmatpush2.bf16.msra.mxu0 %v765
    %845 = vmatprep.mubr.bf16.mxu0 %v620
    %846 = vmatmul.mubr.bf16.gmra.mxu0 %v619
    %v847 = vpop.f32.mrf.mxu0
    %v848 = vadd.f32 0.0, %v847
    %v849 = vpop.f32.mrf.mxu0
    %v850 = vadd.f32 0.0, %v849
    %v851 = vpop.f32.mrf.mxu0
    %v852 = vpop.f32.mrf.mxu0
    %853 = vdwg.mxu0
    %v854 = vmul.f32 %v848, %v848
    %v855 = vmul.f32 %v850, %v850
    %856 = vadd.xlane.f32.xlu0 %v854
    %v857 = vpop.xlane.xlu0 %856
    %858 = vadd.xlane.f32.xlu0 %v855
    %v859 = vpop.xlane.xlu0 %858
    %v860 = vsub.f32 %v857, %v859
    %v861 = vmax.f32 %v618, 1e-24
    %v862 = vrcp.pop %v861
    %v863 = vmul.f32 %v860, %v862
    %v864 = vlaneseq
    %v865 = vshrl.u32 %v864, 7
    %v866 = vsub.s32 4, %v865
    %v867 = vrot.slane %v63, %v866
    %v868 = vlaneseq
    %v869 = vshrl.u32 %v868, 7
    %v870 = vsub.s32 4, %v869
    %v871 = vrot.slane %v64, %v870
    %v872 = vmul.f32 %v863, %v867
    %v873 = vmul.f32 %v863, %v871
    %v874 = vlaneseq
    %v875 = vshrl.u32 %v874, 7
    %v876 = vsub.s32 5, %v875
    %v877 = vrot.slane %v63, %v876
    %v878 = vlaneseq
    %v879 = vshrl.u32 %v878, 7
    %v880 = vsub.s32 5, %v879
    %v881 = vrot.slane %v64, %v880
    %v882 = vadd.f32 %v872, %v877
    %v883 = vadd.f32 %v873, %v881
    %v884 = vmax.f32 %v882, 0.0
    %v885 = vmax.f32 %v883, 0.0
    %v886 = vpack.c.bf16 %v884, %v884
    %v887 = vpack.c.bf16 %v885, %v885
    %v888 = vld [vmem:[#allocation2 + $0x100] sm:$0xf]
    %v889 = vld [vmem:[#allocation2 + $0x104] sm:$0xf]
    %v890 = vld [vmem:[#allocation2 + $0x108] sm:$0xf]
    %v891 = vld [vmem:[#allocation2 + $0x10c] sm:$0xf]
    %v892 = vld [vmem:[#allocation2 + $0x110] sm:$0xf]
    %v893 = vld [vmem:[#allocation2 + $0x114] sm:$0xf]
    %v894 = vld [vmem:[#allocation2 + $0x118] sm:$0xf]
    %v895 = vld [vmem:[#allocation2 + $0x11c] sm:$0xf]
    %v896 = vld [vmem:[#allocation2 + $0x120] sm:$0xf]
    %v897 = vld [vmem:[#allocation2 + $0x124] sm:$0xf]
    %v898 = vld [vmem:[#allocation2 + $0x128] sm:$0xf]
    %v899 = vld [vmem:[#allocation2 + $0x12c] sm:$0xf]
    %v900 = vld [vmem:[#allocation2 + $0x130] sm:$0xf]
    %v901 = vld [vmem:[#allocation2 + $0x134] sm:$0xf]
    %v902 = vld [vmem:[#allocation2 + $0x138] sm:$0xf]
    %v903 = vld [vmem:[#allocation2 + $0x13c] sm:$0xf]
    %v904 = vld [vmem:[#allocation2 + $0x140] sm:$0xf]
    %v905 = vld [vmem:[#allocation2 + $0x144] sm:$0xf]
    %v906 = vld [vmem:[#allocation2 + $0x148] sm:$0xf]
    %v907 = vld [vmem:[#allocation2 + $0x14c] sm:$0xf]
    %v908 = vld [vmem:[#allocation2 + $0x150] sm:$0xf]
    %v909 = vld [vmem:[#allocation2 + $0x154] sm:$0xf]
    %v910 = vld [vmem:[#allocation2 + $0x158] sm:$0xf]
    %v911 = vld [vmem:[#allocation2 + $0x15c] sm:$0xf]
    %v912 = vld [vmem:[#allocation2 + $0x160] sm:$0xf]
    %v913 = vld [vmem:[#allocation2 + $0x164] sm:$0xf]
    %v914 = vld [vmem:[#allocation2 + $0x168] sm:$0xf]
    %v915 = vld [vmem:[#allocation2 + $0x16c] sm:$0xf]
    %v916 = vld [vmem:[#allocation2 + $0x170] sm:$0xf]
    %v917 = vld [vmem:[#allocation2 + $0x174] sm:$0xf]
    %v918 = vld [vmem:[#allocation2 + $0x178] sm:$0xf]
    %v919 = vld [vmem:[#allocation2 + $0x17c] sm:$0xf]
    %v920 = vlaneseq
    %v921 = vshrl.u32 %v920, 7
    %v922 = vsub.s32 6, %v921
    %v923 = vrot.slane %v63, %v922
    %v956 = vunpack.c.l.b16 %v888
    %v957 = vunpack.c.l.b16 %v889
    %v958 = vunpack.c.l.b16 %v890
    %v959 = vunpack.c.l.b16 %v891
    %v960 = vunpack.c.l.b16 %v892
    %v961 = vunpack.c.l.b16 %v893
    %v962 = vunpack.c.l.b16 %v894
    %v963 = vunpack.c.l.b16 %v895
    %v964 = vunpack.c.l.b16 %v896
    %v965 = vunpack.c.l.b16 %v897
    %v966 = vunpack.c.l.b16 %v898
    %v967 = vunpack.c.l.b16 %v899
    %v968 = vunpack.c.l.b16 %v900
    %v969 = vunpack.c.l.b16 %v901
    %v970 = vunpack.c.l.b16 %v902
    %v971 = vunpack.c.l.b16 %v903
    %v972 = vunpack.c.l.b16 %v904
    %v973 = vunpack.c.l.b16 %v905
    %v974 = vunpack.c.l.b16 %v906
    %v975 = vunpack.c.l.b16 %v907
    %v976 = vunpack.c.l.b16 %v908
    %v977 = vunpack.c.l.b16 %v909
    %v978 = vunpack.c.l.b16 %v910
    %v979 = vunpack.c.l.b16 %v911
    %v980 = vunpack.c.l.b16 %v912
    %v981 = vunpack.c.l.b16 %v913
    %v982 = vunpack.c.l.b16 %v914
    %v983 = vunpack.c.l.b16 %v915
    %v984 = vunpack.c.l.b16 %v916
    %v985 = vunpack.c.l.b16 %v917
    %v986 = vunpack.c.l.b16 %v918
    %v987 = vunpack.c.l.b16 %v919
    %v988 = vpack.c.b16 %v957, %v956
    %v989 = vpack.c.b16 %v959, %v958
    %v990 = vpack.c.b16 %v961, %v960
    %v991 = vpack.c.b16 %v963, %v962
    %v992 = vpack.c.b16 %v965, %v964
    %v993 = vpack.c.b16 %v967, %v966
    %v994 = vpack.c.b16 %v969, %v968
    %v995 = vpack.c.b16 %v971, %v970
    %v996 = vpack.c.b16 %v973, %v972
    %v997 = vpack.c.b16 %v975, %v974
    %v998 = vpack.c.b16 %v977, %v976
    %v999 = vpack.c.b16 %v979, %v978
    %v1000 = vpack.c.b16 %v981, %v980
    %v1001 = vpack.c.b16 %v983, %v982
    %v1002 = vpack.c.b16 %v985, %v984
    %v1003 = vpack.c.b16 %v987, %v986
    %1020 = vmatprep.subr.bf16.mxu0 0
    %1021 = vmatpush1.bf16.msra.mxu0 %v995
    %1022 = vmatprep.subr.bf16.mxu0 0
    %1023 = vmatpush1.bf16.msra.mxu0 %v994
    %1024 = vmatprep.subr.bf16.mxu0 0
    %1025 = vmatpush1.bf16.msra.mxu0 %v993
    %1026 = vmatprep.subr.bf16.mxu0 0
    %1027 = vmatpush1.bf16.msra.mxu0 %v992
    %1028 = vmatprep.subr.bf16.mxu0 0
    %1029 = vmatpush1.bf16.msra.mxu0 %v991
    %1030 = vmatprep.subr.bf16.mxu0 0
    %1031 = vmatpush1.bf16.msra.mxu0 %v990
    %1032 = vmatprep.subr.bf16.mxu0 0
    %1033 = vmatpush1.bf16.msra.mxu0 %v989
    %1034 = vmatprep.subr.bf16.mxu0 0
    %1035 = vmatpush1.bf16.msra.mxu0 %v988
    %1036 = vmatprep.subr.bf16.mxu0 0
    %1037 = vmatpush2.bf16.msra.mxu0 %v1003
    %1038 = vmatprep.subr.bf16.mxu0 0
    %1039 = vmatpush2.bf16.msra.mxu0 %v1002
    %1040 = vmatprep.subr.bf16.mxu0 0
    %1041 = vmatpush2.bf16.msra.mxu0 %v1001
    %1042 = vmatprep.subr.bf16.mxu0 0
    %1043 = vmatpush2.bf16.msra.mxu0 %v1000
    %1044 = vmatprep.subr.bf16.mxu0 0
    %1045 = vmatpush2.bf16.msra.mxu0 %v999
    %1046 = vmatprep.subr.bf16.mxu0 0
    %1047 = vmatpush2.bf16.msra.mxu0 %v998
    %1048 = vmatprep.subr.bf16.mxu0 0
    %1049 = vmatpush2.bf16.msra.mxu0 %v997
    %1050 = vmatprep.subr.bf16.mxu0 0
    %1051 = vmatpush2.bf16.msra.mxu0 %v996
    %1052 = vmatprep.mubr.bf16.mxu0 %v887
    %1053 = vmatmul.mubr.bf16.gmra.mxu0 %v886
    %v1054 = vpop.f32.mrf.mxu0
    %v1055 = vadd.f32 %v923, %v1054
    %v1056 = vpop.f32.mrf.mxu0
    %v1057 = vpop.f32.mrf.mxu0
    %v1058 = vpop.f32.mrf.mxu0
    %1059 = vdwg.mxu0
    %v1060 = vmax.f32 %v1055, 0.0
    %v1061 = vpack.c.bf16 %v1060, %v1060
    %v1062 = vld [vmem:[#allocation2 + $0x180] sm:$0xf]
    %v1063 = vld [vmem:[#allocation2 + $0x184] sm:$0xf]
    %v1064 = vld [vmem:[#allocation2 + $0x188] sm:$0xf]
    %v1065 = vld [vmem:[#allocation2 + $0x18c] sm:$0xf]
    %v1066 = vld [vmem:[#allocation2 + $0x190] sm:$0xf]
    %v1067 = vld [vmem:[#allocation2 + $0x194] sm:$0xf]
    %v1068 = vld [vmem:[#allocation2 + $0x198] sm:$0xf]
    %v1069 = vld [vmem:[#allocation2 + $0x19c] sm:$0xf]
    %v1070 = vld [vmem:[#allocation2 + $0x1a0] sm:$0xf]
    %v1071 = vld [vmem:[#allocation2 + $0x1a4] sm:$0xf]
    %v1072 = vld [vmem:[#allocation2 + $0x1a8] sm:$0xf]
    %v1073 = vld [vmem:[#allocation2 + $0x1ac] sm:$0xf]
    %v1074 = vld [vmem:[#allocation2 + $0x1b0] sm:$0xf]
    %v1075 = vld [vmem:[#allocation2 + $0x1b4] sm:$0xf]
    %v1076 = vld [vmem:[#allocation2 + $0x1b8] sm:$0xf]
    %v1077 = vld [vmem:[#allocation2 + $0x1bc] sm:$0xf]
    %v1078 = vlaneseq
    %v1079 = vshrl.u32 %v1078, 7
    %v1080 = vsub.s32 7, %v1079
    %v1081 = vrot.slane %v63, %v1080
    %v1098 = vunpack.c.l.b16 %v1062
    %v1099 = vunpack.c.l.b16 %v1063
    %v1100 = vunpack.c.l.b16 %v1064
    %v1101 = vunpack.c.l.b16 %v1065
    %v1102 = vunpack.c.l.b16 %v1066
    %v1103 = vunpack.c.l.b16 %v1067
    %v1104 = vunpack.c.l.b16 %v1068
    %v1105 = vunpack.c.l.b16 %v1069
    %v1106 = vunpack.c.l.b16 %v1070
    %v1107 = vunpack.c.l.b16 %v1071
    %v1108 = vunpack.c.l.b16 %v1072
    %v1109 = vunpack.c.l.b16 %v1073
    %v1110 = vunpack.c.l.b16 %v1074
    %v1111 = vunpack.c.l.b16 %v1075
    %v1112 = vunpack.c.l.b16 %v1076
    %v1113 = vunpack.c.l.b16 %v1077
    %v1114 = vpack.c.b16 %v1099, %v1098
    %v1115 = vpack.c.b16 %v1101, %v1100
    %v1116 = vpack.c.b16 %v1103, %v1102
    %v1117 = vpack.c.b16 %v1105, %v1104
    %v1118 = vpack.c.b16 %v1107, %v1106
    %v1119 = vpack.c.b16 %v1109, %v1108
    %v1120 = vpack.c.b16 %v1111, %v1110
    %v1121 = vpack.c.b16 %v1113, %v1112
    %1130 = vmatprep.subr.bf16.mxu0 0
    %1131 = vmatpush1.bf16.msra.mxu0 %v1121
    %1132 = vmatprep.subr.bf16.mxu0 0
    %1133 = vmatpush1.bf16.msra.mxu0 %v1120
    %1134 = vmatprep.subr.bf16.mxu0 0
    %1135 = vmatpush1.bf16.msra.mxu0 %v1119
    %1136 = vmatprep.subr.bf16.mxu0 0
    %1137 = vmatpush1.bf16.msra.mxu0 %v1118
    %1138 = vmatprep.subr.bf16.mxu0 0
    %1139 = vmatpush1.bf16.msra.mxu0 %v1117
    %1140 = vmatprep.subr.bf16.mxu0 0
    %1141 = vmatpush1.bf16.msra.mxu0 %v1116
    %1142 = vmatprep.subr.bf16.mxu0 0
    %1143 = vmatpush1.bf16.msra.mxu0 %v1115
    %1144 = vmatprep.subr.bf16.mxu0 0
    %1145 = vmatpush1.bf16.msra.mxu0 %v1114
    %1146 = vmatprep.subr.bf16.mxu0 0
    %1147 = vmatpush2.bf16.msra.mxu0 0
    %1148 = vmatprep.subr.bf16.mxu0 0
    %1149 = vmatpush2.bf16.msra.mxu0 0
    %1150 = vmatprep.subr.bf16.mxu0 0
    %1151 = vmatpush2.bf16.msra.mxu0 0
    %1152 = vmatprep.subr.bf16.mxu0 0
    %1153 = vmatpush2.bf16.msra.mxu0 0
    %1154 = vmatprep.subr.bf16.mxu0 0
    %1155 = vmatpush2.bf16.msra.mxu0 0
    %1156 = vmatprep.subr.bf16.mxu0 0
    %1157 = vmatpush2.bf16.msra.mxu0 0
    %1158 = vmatprep.subr.bf16.mxu0 0
    %1159 = vmatpush2.bf16.msra.mxu0 0
    %1160 = vmatprep.subr.bf16.mxu0 0
    %1161 = vmatpush2.bf16.msra.mxu0 0
    %1162 = vmatprep.mubr.bf16.mxu0 0
    %1163 = vmatmul.mubr.bf16.gmra.mxu0 %v1061
    %v1164 = vpop.f32.mrf.mxu0
    %v1165 = vadd.f32 %v1081, %v1164
    %v1166 = vpop.f32.mrf.mxu0
    %v1167 = vpop.f32.mrf.mxu0
    %v1168 = vpop.f32.mrf.mxu0
    %1169 = vdwg.mxu0
    %v1170 = vmax.f32 %v1165, 0.0
    %v1171 = vlaneseq
    %v1172 = vshrl.u32 %v1171, 7
    %v1173 = vsub.s32 0, %v1172
    %v1174 = vrot.slane %v65, %v1173
    %v1175 = vmul.f32 %v1170, %v1174
    %1176 = vadd.xlane.f32.xlu0 %v1175
    %v1177 = vpop.xlane.xlu0 %1176
    %v1178 = vlaneseq
    %v1179 = vshrl.u32 %v1178, 7
    %v1180 = vsub.s32 1, %v1179
    %v1181 = vrot.slane %v65, %v1180
    %v1182 = vadd.f32 %v1177, %v1181
    %v1183 = vsub.f32 0.0, %v1182
    %v1184 = vmul.f32 %v1183, 1.442695
    %v1185 = vpow.pop %v1184
    %v1186 = vadd.f32 %v1185, 1.0
    %v1187 = vrcp.pop %v1186
    %v1188 = vmul.f32 1.0, %v1187
    %vm1189 = vcmask 7168
    %1190 = vst.msk [vmem:[%s5] sm:$0xff] %vm1189, %v1188
    // Predicated region
    $region34: #{model_forward.1} parent=1 // pred_check
      _
    $region35: #{model_forward.1} parent=1 // pred_check_branch
      %1192 = sbr.rel (0) target = $region37
    $region36: #{model_forward.1} parent=1 // pred_region
      _
    $region37: #{model_forward.1} parent=1 // pred_fallthru
      _
    // Predicated region
    $region38: #{model_forward.1} parent=1 // pred_check
      _
    $region39: #{model_forward.1} parent=1 // pred_check_branch
      %1194 = sbr.rel (0) target = $region41
    $region40: #{model_forward.1} parent=1 // pred_region
      _
    $region41: #{model_forward.1} parent=1 // pred_fallthru
      _
    %1195 = vsyncpa [#allocation3], 1
    %1196 = vsyncpa [#allocation5], 1

</llo_original>
